<compile_context>
chip_gen: v5e
topology: v5e:2x2
jax: 0.10.0
libtpu: 0.0.40
codegen_flags: <defaults>
</compile_context>

<pallas_src>
import functools
import math

import jax
import jax.numpy as jnp
from jax.experimental import pallas as pl
from jax.experimental.pallas import tpu as pltpu


def _layernorm_kernel(x_ref, w_ref, b_ref, o_ref, *, eps, inv_d):
    # x_ref: (TM, D)   w_ref/b_ref: (1, D)   o_ref: (TM, D)
    x = x_ref[...].astype(jnp.float32)
    # Pass 1: mean.
    mean = jnp.sum(x, axis=-1, keepdims=True) * inv_d
    # Pass 2 (centered, numerically stable; x is already resident in VMEM/vregs).
    xc = x - mean
    var = jnp.sum(xc * xc, axis=-1, keepdims=True) * inv_d  # biased var (PyTorch LN)
    inv = jax.lax.rsqrt(var + eps)                           # EUP
    y = xc * inv
    y = y * w_ref[...] + b_ref[...]                          # w/b already f32
    o_ref[...] = y.astype(o_ref.dtype)


def _round_up(a, m):
    return ((a + m - 1) // m) * m


def _vmem_capacity_bytes():
    try:
        return int(pltpu.get_tpu_info().vmem_capacity_bytes)
    except Exception:
        # Conservative fallback: assume the smallest per-TC VMEM (v7x, 64 MiB).
        return 64 << 20


def layer_norm_pallas(x, weight, bias, eps=1e-5):
    """x: (N, ...). weight/bias: shape x.shape[1:] (or None). Normalizes over all non-batch dims."""
    n = x.shape[0]
    d = int(math.prod(x.shape[1:]))

    x2 = x.reshape(n, d)
    # Cast affine params to f32 once here (not per grid step inside the kernel).
    if weight is None:
        w2 = jnp.ones((1, d), dtype=jnp.float32)
    else:
        w2 = weight.reshape(1, d).astype(jnp.float32)
    if bias is None:
        b2 = jnp.zeros((1, d), dtype=jnp.float32)
    else:
        b2 = bias.reshape(1, d).astype(jnp.float32)

    # Sublane alignment for the row axis: 8 rows for 4-byte dtypes, 16 for 2-byte, 32 for 1-byte.
    itemsize = jnp.dtype(x.dtype).itemsize
    sublane = max(8, 32 // max(itemsize, 1))

    # Generation-aware HBM tile target and scoped VMEM limit.
    vmem_cap = _vmem_capacity_bytes()
    if vmem_cap >= (96 << 20):          # v5e / v6e: 128 MiB physical VMEM
        target_tile_bytes = 8 << 20
        vmem_limit = 96 << 20
    else:                               # v7x: 64 MiB per TensorCore
        target_tile_bytes = 4 << 20
        vmem_limit = 48 << 20

    # TM sized from the input itemsize (HBM-side bytes per step), sublane-aligned.
    rows_for_target = max(
        sublane, (target_tile_bytes // max(d * itemsize, 1)) // sublane * sublane
    )
    tm = min(rows_for_target, _round_up(n, sublane))

    # Guarantee >=2 grid steps when possible so v7x's two TensorCores both stream
    # (harmless extra step on single-TC v5e/v6e).
    while pl.cdiv(n, tm) < 2 and tm > sublane:
        tm = max(sublane, _round_up(tm // 2, sublane))

    # TODO(synk): for very large D the minimal (sublane x D) tile plus double buffers
    # and f32 temporaries can exceed vmem_limit (compile-time VMEM OOM); fall back to
    # splitting D across a second "arbitrary" grid axis with per-row partial-sum
    # scratch accumulators (two-pass scheme). Not needed at these shapes.

    kernel = functools.partial(_layernorm_kernel, eps=float(eps), inv_d=1.0 / float(d))

    grid = (pl.cdiv(n, tm),)
    out = pl.pallas_call(
        kernel,
        out_shape=jax.ShapeDtypeStruct((n, d), x.dtype),
        grid=grid,
        in_specs=[
            pl.BlockSpec((tm, d), lambda i: (i, 0)),
            pl.BlockSpec((1, d), lambda i: (0, 0)),
            pl.BlockSpec((1, d), lambda i: (0, 0)),
        ],
        out_specs=pl.BlockSpec((tm, d), lambda i: (i, 0)),
        compiler_params=pltpu.CompilerParams(
            dimension_semantics=("parallel",),   # row tiles are independent (v7x megacore)
            vmem_limit_bytes=vmem_limit,
        ),
    )(x2, w2, b2)

    return out.reshape(x.shape)


if __name__ == "__main__":
    key = jax.random.PRNGKey(0)
    N, C, H, W = 2, 4, 16, 16
    x = jax.random.normal(key, (N, C, H, W), dtype=jnp.float32)

    # Deterministic parameter init, matching reset_parameters(): weight=1, bias=0.
    weight = jnp.ones((C, H, W), dtype=jnp.float32)
    bias = jnp.zeros((C, H, W), dtype=jnp.float32)

    eps = 1e-5
    out = layer_norm_pallas(x, weight, bias, eps=eps)
    out = jax.block_until_ready(out)

    # Pure-JAX reference (F.layer_norm over all non-batch dims, biased centered var).
    xf = x.reshape(N, -1)
    mean = jnp.mean(xf, axis=-1, keepdims=True)
    var = jnp.mean((xf - mean) ** 2, axis=-1, keepdims=True)
    ref = ((xf - mean) / jnp.sqrt(var + eps)).reshape(x.shape)
    ref = ref * weight[None] + bias[None]

    # Tight tolerance: kernel now uses the centered two-pass variance.
    assert jnp.allclose(out, ref, atol=1e-5, rtol=1e-5), (
        float(jnp.max(jnp.abs(out - ref)))
    )
    print("KERNEL_OK")
</pallas_src>

<mosaic_0001>
module attributes {stable_mosaic.version = 11 : i64} {
  func.func @_layernorm_kernel(%arg0: i32, %arg1: memref<8x1024xf32, #tpu.memory_space<vmem>>, %arg2: memref<1x1024xf32, #tpu.memory_space<vmem>>, %arg3: memref<1x1024xf32, #tpu.memory_space<vmem>>, %arg4: memref<8x1024xf32, #tpu.memory_space<vmem>>) attributes {dimension_semantics = [#tpu.dimension_semantics<parallel>], iteration_bounds = array<i64: 1>, scalar_prefetch = 0 : i64, scratch_operands = 0 : i64, tpu.core_type = #tpu.core_type<tc>, window_params = [{transform_indices = @transform_0, window_bounds = array<i64: 8, 1024>}, {pipeline_mode = #tpu.pipeline_mode<synchronous>, transform_indices = @transform_1, window_bounds = array<i64: 1, 1024>}, {pipeline_mode = #tpu.pipeline_mode<synchronous>, transform_indices = @transform_2, window_bounds = array<i64: 1, 1024>}, {transform_indices = @transform_3, window_bounds = array<i64: 8, 1024>}]} {
    %c0 = arith.constant 0 : index
    %c0_0 = arith.constant 0 : index
    %0 = vector.load %arg1[%c0, %c0_0] : memref<8x1024xf32, #tpu.memory_space<vmem>>, vector<8x1024xf32>
    %cst = arith.constant dense<0.000000e+00> : vector<8xf32>
    %1 = vector.multi_reduction <add>, %0, %cst [1] : vector<8x1024xf32> to vector<8xf32>
    %2 = vector.shape_cast %1 : vector<8xf32> to vector<8x1xf32>
    %cst_1 = arith.constant 9.765625E-4 : f32
    %3 = vector.broadcast %cst_1 : f32 to vector<8x1xf32>
    %4 = arith.mulf %2, %3 : vector<8x1xf32>
    %5 = vector.broadcast %4 : vector<8x1xf32> to vector<8x1024xf32>
    %6 = arith.subf %0, %5 : vector<8x1024xf32>
    %7 = arith.mulf %6, %6 : vector<8x1024xf32>
    %cst_2 = arith.constant dense<0.000000e+00> : vector<8xf32>
    %8 = vector.multi_reduction <add>, %7, %cst_2 [1] : vector<8x1024xf32> to vector<8xf32>
    %9 = vector.shape_cast %8 : vector<8xf32> to vector<8x1xf32>
    %cst_3 = arith.constant 9.765625E-4 : f32
    %10 = vector.broadcast %cst_3 : f32 to vector<8x1xf32>
    %11 = arith.mulf %9, %10 : vector<8x1xf32>
    %cst_4 = arith.constant 9.99999974E-6 : f32
    %12 = vector.broadcast %cst_4 : f32 to vector<8x1xf32>
    %13 = arith.addf %11, %12 : vector<8x1xf32>
    %14 = math.rsqrt %13 : vector<8x1xf32>
    %15 = vector.broadcast %14 : vector<8x1xf32> to vector<8x1024xf32>
    %16 = arith.mulf %6, %15 : vector<8x1024xf32>
    %c0_5 = arith.constant 0 : index
    %c0_6 = arith.constant 0 : index
    %17 = vector.load %arg2[%c0_5, %c0_6] : memref<1x1024xf32, #tpu.memory_space<vmem>>, vector<1x1024xf32>
    %18 = vector.broadcast %17 : vector<1x1024xf32> to vector<8x1024xf32>
    %19 = arith.mulf %16, %18 : vector<8x1024xf32>
    %c0_7 = arith.constant 0 : index
    %c0_8 = arith.constant 0 : index
    %20 = vector.load %arg3[%c0_7, %c0_8] : memref<1x1024xf32, #tpu.memory_space<vmem>>, vector<1x1024xf32>
    %21 = vector.broadcast %20 : vector<1x1024xf32> to vector<8x1024xf32>
    %22 = arith.addf %19, %21 : vector<8x1024xf32>
    %c0_9 = arith.constant 0 : index
    %c0_10 = arith.constant 0 : index
    %23 = vector.load %arg4[%c0_9, %c0_10] : memref<8x1024xf32, #tpu.memory_space<vmem>>, vector<8x1024xf32>
    tpu.vector_store %arg4[%c0_9, %c0_10], %22 {strides = array<i32>} : memref<8x1024xf32, #tpu.memory_space<vmem>>, vector<8x1024xf32>,
    return
  }
  func.func @transform_0(%arg0: i32) -> (i32, i32) {
    %c0_i32 = arith.constant 0 : i32
    %c0_i32_0 = arith.constant 0 : i32
    return %arg0, %c0_i32 : i32, i32
  }
  func.func @transform_1(%arg0: i32) -> (i32, i32) {
    %c0_i32 = arith.constant 0 : i32
    %c0_i32_0 = arith.constant 0 : i32
    %c0_i32_1 = arith.constant 0 : i32
    return %c0_i32, %c0_i32_0 : i32, i32
  }
  func.func @transform_2(%arg0: i32) -> (i32, i32) {
    %c0_i32 = arith.constant 0 : i32
    %c0_i32_0 = arith.constant 0 : i32
    %c0_i32_1 = arith.constant 0 : i32
    return %c0_i32, %c0_i32_0 : i32, i32
  }
  func.func @transform_3(%arg0: i32) -> (i32, i32) {
    %c0_i32 = arith.constant 0 : i32
    %c0_i32_0 = arith.constant 0 : i32
    return %arg0, %c0_i32 : i32, i32
  }
}

</mosaic_0001>

<llo_original>
// kernel: tpu_custom_call.1
$region0: #{tpu_custom_call.1}
  #allocation0 [shape = 'u32[]', space=smem, size = 0x4, offset = 0x4, fixed_abs, tag = 'smem constant byte address 0x4 - core index']
  #allocation1 [shape = 'u32[72,128]{1,0:T(1,128)}', space=vmem, size = 0x9000, scoped, tag = 'internal scratch']
  %s0 = inlined_call_operand.hbm [shape: f32[2,1024], index: 0, kind: input, shape index: {}]
  %s1 = inlined_call_operand.hbm [shape: f32[1,1024], index: 1, kind: input, shape index: {}]
  %s2 = inlined_call_operand.hbm [shape: f32[1,1024], index: 2, kind: input, shape index: {}]
  %s3 = inlined_call_operand.hbm [shape: f32[2,1024], index: 3, kind: output, shape index: {}]
  %s4 = sld [smem:[#allocation0]]
  $region34: #{tpu_custom_call.1} parent=0
    _
  %s6 = ssub.s32 1, %s4
  %s7 = scalar_select 0, %s6, %s4
  $region1: #{tpu_custom_call.1} parent=0
    #allocation2 [shape = 'u8[32768]{0}', space=vmem, size = 0x8000, scoped, tag = 'input window, operand 0, single buffered']
    #allocation3 [shape = 's32[1]{0}', space=sflag, size = 0x4, scoped, tag = 'scoped memory for tpu_custom_call.1']
    #allocation4 [shape = 's32[1]{0}', space=sflag, size = 0x4, scoped, tag = 'scoped memory for tpu_custom_call.1']
    #allocation5 [shape = 'u8[4096]{0}', space=vmem, size = 0x1000, scoped, tag = 'input window, operand 1, single buffered']
    #allocation6 [shape = 's32[1]{0}', space=sflag, size = 0x4, scoped, tag = 'scoped memory for tpu_custom_call.1']
    #allocation7 [shape = 'u8[4096]{0}', space=vmem, size = 0x1000, scoped, tag = 'input window, operand 2, single buffered']
    #allocation8 [shape = 'u8[32768]{0}', space=vmem, size = 0x8000, scoped, tag = 'output window, operand 0, single buffered']
    %8 = vsyncpa [#allocation3], 0
    %9 = vsyncpa [#allocation6], 0
    %10 = vsyncpa [#allocation4], 0
    // Predicated region
    $region2: #{tpu_custom_call.1} parent=1 // pred_check
      _
    $region3: #{tpu_custom_call.1} parent=1 // pred_check_branch
      %12 = sbr.rel (0) target = $region5
    $region4: #{tpu_custom_call.1} parent=1 // pred_region
      %14 = vsyncadd [#allocation3], 768
      %s15 = sshll.u32 %s0, 4
      %s16 = int_to_ptr.hbm [resolvable:$true] %s15
      %s17 = sshll.u32 [#allocation2], 4
      %s18 = int_to_ptr.vmem [resolvable:$true] %s17
      %23 = dma.hbm_to_vmem [thread:$0]  %s16, 256, %s18, [#allocation3], 256, 256, 16
    $region5: #{tpu_custom_call.1} parent=1 // pred_fallthru
      _
    // Predicated region
    $region6: #{tpu_custom_call.1} parent=1 // pred_check
      _
    $region7: #{tpu_custom_call.1} parent=1 // pred_check_branch
      %25 = sbr.rel (0) target = $region9
    $region8: #{tpu_custom_call.1} parent=1 // pred_region
      %27 = vsyncadd [#allocation6], 0
      %s29 = sshll.u32 %s1, 4
      %s30 = int_to_ptr.hbm [resolvable:$true] %s29
      %s31 = sshll.u32 [#allocation5], 4
      %s32 = int_to_ptr.vmem [resolvable:$true] %s31
      %34 = dma.hbm_to_vmem [thread:$0]  %s30, 128, %s32, [#allocation6]
    $region9: #{tpu_custom_call.1} parent=1 // pred_fallthru
      _
    // Predicated region
    $region10: #{tpu_custom_call.1} parent=1 // pred_check
      _
    $region11: #{tpu_custom_call.1} parent=1 // pred_check_branch
      %36 = sbr.rel (0) target = $region13
    $region12: #{tpu_custom_call.1} parent=1 // pred_region
      %38 = vsyncadd [#allocation6], 0
      %s40 = sshll.u32 %s2, 4
      %s41 = int_to_ptr.hbm [resolvable:$true] %s40
      %s42 = sshll.u32 [#allocation7], 4
      %s43 = int_to_ptr.vmem [resolvable:$true] %s42
      %45 = dma.hbm_to_vmem [thread:$0]  %s41, 128, %s43, [#allocation6]
    $region13: #{tpu_custom_call.1} parent=1 // pred_fallthru
      _
    // Predicated region
    $region14: #{tpu_custom_call.1} parent=1 // pred_check
      _
    $region15: #{tpu_custom_call.1} parent=1 // pred_check_branch
      %47 = sbr.rel (0) target = $region17
    $region16: #{tpu_custom_call.1} parent=1 // pred_region
      %49 = dma.done [#allocation3], 1024
    $region17: #{tpu_custom_call.1} parent=1 // pred_fallthru
      _
    // Predicated region
    $region18: #{tpu_custom_call.1} parent=1 // pred_check
      _
    $region19: #{tpu_custom_call.1} parent=1 // pred_check_branch
      %51 = sbr.rel (0) target = $region21
    $region20: #{tpu_custom_call.1} parent=1 // pred_region
      %53 = dma.done [#allocation6], 128
    $region21: #{tpu_custom_call.1} parent=1 // pred_fallthru
      _
    // Predicated region
    $region22: #{tpu_custom_call.1} parent=1 // pred_check
      _
    $region23: #{tpu_custom_call.1} parent=1 // pred_check_branch
      %55 = sbr.rel (0) target = $region25
    $region24: #{tpu_custom_call.1} parent=1 // pred_region
      %57 = dma.done [#allocation6], 128
    $region25: #{tpu_custom_call.1} parent=1 // pred_fallthru
      _
    %v58 = vld [vmem:[#allocation2] sm:$0xff]
    %v59 = vld [vmem:[#allocation2 + $0x8] sm:$0xff]
    %v60 = vld [vmem:[#allocation2 + $0x10] sm:$0xff]
    %v61 = vld [vmem:[#allocation2 + $0x18] sm:$0xff]
    %v62 = vld [vmem:[#allocation2 + $0x20] sm:$0xff]
    %v63 = vld [vmem:[#allocation2 + $0x28] sm:$0xff]
    %v64 = vld [vmem:[#allocation2 + $0x30] sm:$0xff]
    %v65 = vld [vmem:[#allocation2 + $0x38] sm:$0xff]
    %74 = vst [vmem:[#allocation1] ss:$4 sm:$0xff] %v58
    %s75 = scalar_lea.vmem [#allocation1], 1
    %76 = vst [vmem:[%s75] ss:$4 sm:$0xff] %v60
    %s77 = scalar_lea.vmem [#allocation1], 2
    %78 = vst [vmem:[%s77] ss:$4 sm:$0xff] %v62
    %s79 = scalar_lea.vmem [#allocation1], 3
    %80 = vst [vmem:[%s79] ss:$4 sm:$0xff] %v64
    %s81 = scalar_lea.vmem [#allocation1], 32
    %82 = vst [vmem:[%s81] ss:$4 sm:$0xff] %v59
    %s83 = scalar_lea.vmem [#allocation1], 33
    %84 = vst [vmem:[%s83] ss:$4 sm:$0xff] %v61
    %s85 = scalar_lea.vmem [#allocation1], 34
    %86 = vst [vmem:[%s85] ss:$4 sm:$0xff] %v63
    %s87 = scalar_lea.vmem [#allocation1], 35
    %88 = vst [vmem:[%s87] ss:$4 sm:$0xff] %v65
    %v89 = vld.sshfl [vmem:[#allocation1] sm:$0xff pattern:$0x73625140]
    %v90 = vld.sshfl [vmem:[#allocation1 + $0x8] sm:$0xff pattern:$0x73625140]
    %v91 = vld.sshfl [vmem:[#allocation1 + $0x10] sm:$0xff pattern:$0x73625140]
    %v92 = vld.sshfl [vmem:[#allocation1 + $0x18] sm:$0xff pattern:$0x73625140]
    %v93 = vld.sshfl [vmem:[#allocation1 + $0x20] sm:$0xff pattern:$0x73625140]
    %v94 = vld.sshfl [vmem:[#allocation1 + $0x28] sm:$0xff pattern:$0x73625140]
    %v95 = vld.sshfl [vmem:[#allocation1 + $0x30] sm:$0xff pattern:$0x73625140]
    %v96 = vld.sshfl [vmem:[#allocation1 + $0x38] sm:$0xff pattern:$0x73625140]
    %v105 = vadd.f32 %v89, %v90
    %v106 = vadd.f32 %v105, %v91
    %v107 = vadd.f32 %v106, %v92
    %v108 = vadd.f32 %v107, %v93
    %v109 = vadd.f32 %v108, %v94
    %v110 = vadd.f32 %v109, %v95
    %v111 = vadd.f32 %v110, %v96
    %112 = vadd.xlane.f32.xlu0 %v111
    %v113 = vpop.xlane.xlu0 %112
    %v114 = vmul.f32 %v113, 0.0009765625
    %v117 = vunpack.c.l.s4 269488144
    %v118 = vunpack.c.0.s8 %v117
    %v119 = vperm.slane %v114, %v118
    %v121 = vunpack.c.l.s4 842150450
    %v122 = vunpack.c.0.s8 %v121
    %v123 = vperm.slane %v114, %v122
    %v125 = vunpack.c.l.s4 1414812756
    %v126 = vunpack.c.0.s8 %v125
    %v127 = vperm.slane %v114, %v126
    %v129 = vunpack.c.l.s4 1987475062
    %v130 = vunpack.c.0.s8 %v129
    %v131 = vperm.slane %v114, %v130
    %v136 = vsub.f32 %v58, %v119
    %v137 = vsub.f32 %v59, %v119
    %v138 = vsub.f32 %v60, %v123
    %v139 = vsub.f32 %v61, %v123
    %v140 = vsub.f32 %v62, %v127
    %v141 = vsub.f32 %v63, %v127
    %v142 = vsub.f32 %v64, %v131
    %v143 = vsub.f32 %v65, %v131
    %v144 = vmul.f32 %v136, %v136
    %v145 = vmul.f32 %v137, %v137
    %v146 = vmul.f32 %v138, %v138
    %v147 = vmul.f32 %v139, %v139
    %v148 = vmul.f32 %v140, %v140
    %v149 = vmul.f32 %v141, %v141
    %v150 = vmul.f32 %v142, %v142
    %v151 = vmul.f32 %v143, %v143
    %160 = vst [vmem:[#allocation1] ss:$4 sm:$0xff] %v144
    %s161 = scalar_lea.vmem [#allocation1], 1
    %162 = vst [vmem:[%s161] ss:$4 sm:$0xff] %v146
    %s163 = scalar_lea.vmem [#allocation1], 2
    %164 = vst [vmem:[%s163] ss:$4 sm:$0xff] %v148
    %s165 = scalar_lea.vmem [#allocation1], 3
    %166 = vst [vmem:[%s165] ss:$4 sm:$0xff] %v150
    %s167 = scalar_lea.vmem [#allocation1], 32
    %168 = vst [vmem:[%s167] ss:$4 sm:$0xff] %v145
    %s169 = scalar_lea.vmem [#allocation1], 33
    %170 = vst [vmem:[%s169] ss:$4 sm:$0xff] %v147
    %s171 = scalar_lea.vmem [#allocation1], 34
    %172 = vst [vmem:[%s171] ss:$4 sm:$0xff] %v149
    %s173 = scalar_lea.vmem [#allocation1], 35
    %174 = vst [vmem:[%s173] ss:$4 sm:$0xff] %v151
    %v175 = vld.sshfl [vmem:[#allocation1] sm:$0xff pattern:$0x73625140]
    %v176 = vld.sshfl [vmem:[#allocation1 + $0x8] sm:$0xff pattern:$0x73625140]
    %v177 = vld.sshfl [vmem:[#allocation1 + $0x10] sm:$0xff pattern:$0x73625140]
    %v178 = vld.sshfl [vmem:[#allocation1 + $0x18] sm:$0xff pattern:$0x73625140]
    %v179 = vld.sshfl [vmem:[#allocation1 + $0x20] sm:$0xff pattern:$0x73625140]
    %v180 = vld.sshfl [vmem:[#allocation1 + $0x28] sm:$0xff pattern:$0x73625140]
    %v181 = vld.sshfl [vmem:[#allocation1 + $0x30] sm:$0xff pattern:$0x73625140]
    %v182 = vld.sshfl [vmem:[#allocation1 + $0x38] sm:$0xff pattern:$0x73625140]
    %v191 = vadd.f32 %v175, %v176
    %v192 = vadd.f32 %v191, %v177
    %v193 = vadd.f32 %v192, %v178
    %v194 = vadd.f32 %v193, %v179
    %v195 = vadd.f32 %v194, %v180
    %v196 = vadd.f32 %v195, %v181
    %v197 = vadd.f32 %v196, %v182
    %198 = vadd.xlane.f32.xlu0 %v197
    %v199 = vpop.xlane.xlu0 %198
    %v200 = vmul.f32 %v199, 0.0009765625
    %v201 = vadd.f32 %v200, 1e-05
    %v202 = vrsqrt.pop %v201
    %v203 = vmul.f32 %v202, %v201
    %v204 = vmul.f32 %v203, %v202
    %v205 = vmul.f32 0.5, %v204
    %v206 = vsub.f32 1.5, %v205
    %v207 = vmul.f32 %v202, %v206
    %vm208 = vweird.f32 %v201
    %vm209 = vweird.f32 %v202
    %vm210 = vmor %vm208, %vm209
    %v211 = vsel %vm210, %v202, %v207
    %v214 = vunpack.c.l.s4 269488144
    %v215 = vunpack.c.0.s8 %v214
    %v216 = vperm.slane %v211, %v215
    %v218 = vunpack.c.l.s4 842150450
    %v219 = vunpack.c.0.s8 %v218
    %v220 = vperm.slane %v211, %v219
    %v222 = vunpack.c.l.s4 1414812756
    %v223 = vunpack.c.0.s8 %v222
    %v224 = vperm.slane %v211, %v223
    %v226 = vunpack.c.l.s4 1987475062
    %v227 = vunpack.c.0.s8 %v226
    %v228 = vperm.slane %v211, %v227
    %v233 = vmul.f32 %v136, %v216
    %v234 = vmul.f32 %v137, %v216
    %v235 = vmul.f32 %v138, %v220
    %v236 = vmul.f32 %v139, %v220
    %v237 = vmul.f32 %v140, %v224
    %v238 = vmul.f32 %v141, %v224
    %v239 = vmul.f32 %v142, %v228
    %v240 = vmul.f32 %v143, %v228
    %v241 = vld [vmem:[#allocation5] sm:$0xff]
    %v243 = vperm.slane %v241, 0
    %v244 = vperm.slane %v241, 1
    %v245 = vperm.slane %v241, 2
    %v246 = vperm.slane %v241, 3
    %v247 = vperm.slane %v241, 4
    %v248 = vperm.slane %v241, 5
    %v249 = vperm.slane %v241, 6
    %v250 = vperm.slane %v241, 7
    %v251 = vrot.slane %v244, 6
    %v252 = vrot.slane %v245, 4
    %v253 = vrot.slane %v246, 2
    %v254 = vrot.slane %v248, 6
    %v255 = vrot.slane %v249, 4
    %v256 = vrot.slane %v250, 2
    %vm257 = vcmask 1041408
    %v258 = vsel %vm257, %v243, %v251
    %vm259 = vcmask 1045508
    %v260 = vsel %vm259, %v252, %v253
    %vm261 = vcmask 1043456
    %v262 = vsel %vm261, %v258, %v260
    %v263 = vsel %vm257, %v247, %v254
    %v264 = vsel %vm259, %v255, %v256
    %v265 = vsel %vm261, %v263, %v264
    %vm266 = vcmask 1043458
    %v267 = vsel %vm266, %v243, %v251
    %vm268 = vcmask 1045504
    %v269 = vsel %vm268, %v253, %v252
    %vm270 = vcmask 1045506
    %v271 = vsel %vm270, %v267, %v269
    %v272 = vrot.slane %v271, 2
    %v273 = vsel %vm266, %v247, %v254
    %v274 = vsel %vm268, %v256, %v255
    %v275 = vsel %vm270, %v273, %v274
    %v276 = vrot.slane %v275, 2
    %v277 = vsel %vm259, %v243, %v251
    %v278 = vsel %vm257, %v252, %v253
    %v279 = vsel %vm261, %v278, %v277
    %v280 = vrot.slane %v279, 4
    %v281 = vsel %vm259, %v247, %v254
    %v282 = vsel %vm257, %v255, %v256
    %v283 = vsel %vm261, %v282, %v281
    %v284 = vrot.slane %v283, 4
    %v285 = vsel %vm268, %v251, %v243
    %v286 = vsel %vm266, %v252, %v253
    %v287 = vsel %vm270, %v286, %v285
    %v288 = vrot.slane %v287, 6
    %v289 = vsel %vm268, %v254, %v247
    %v290 = vsel %vm266, %v255, %v256
    %v291 = vsel %vm270, %v290, %v289
    %v292 = vrot.slane %v291, 6
    %v301 = vmul.f32 %v233, %v262
    %v302 = vmul.f32 %v234, %v265
    %v303 = vmul.f32 %v235, %v272
    %v304 = vmul.f32 %v236, %v276
    %v305 = vmul.f32 %v237, %v280
    %v306 = vmul.f32 %v238, %v284
    %v307 = vmul.f32 %v239, %v288
    %v308 = vmul.f32 %v240, %v292
    %v309 = vld [vmem:[#allocation7] sm:$0xff]
    %v311 = vperm.slane %v309, 0
    %v312 = vperm.slane %v309, 1
    %v313 = vperm.slane %v309, 2
    %v314 = vperm.slane %v309, 3
    %v315 = vperm.slane %v309, 4
    %v316 = vperm.slane %v309, 5
    %v317 = vperm.slane %v309, 6
    %v318 = vperm.slane %v309, 7
    %v319 = vrot.slane %v312, 6
    %v320 = vrot.slane %v313, 4
    %v321 = vrot.slane %v314, 2
    %v322 = vrot.slane %v316, 6
    %v323 = vrot.slane %v317, 4
    %v324 = vrot.slane %v318, 2
    %v325 = vsel %vm257, %v311, %v319
    %v326 = vsel %vm259, %v320, %v321
    %v327 = vsel %vm261, %v325, %v326
    %v328 = vsel %vm257, %v315, %v322
    %v329 = vsel %vm259, %v323, %v324
    %v330 = vsel %vm261, %v328, %v329
    %v331 = vsel %vm266, %v311, %v319
    %v332 = vsel %vm268, %v321, %v320
    %v333 = vsel %vm270, %v331, %v332
    %v334 = vrot.slane %v333, 2
    %v335 = vsel %vm266, %v315, %v322
    %v336 = vsel %vm268, %v324, %v323
    %v337 = vsel %vm270, %v335, %v336
    %v338 = vrot.slane %v337, 2
    %v339 = vsel %vm259, %v311, %v319
    %v340 = vsel %vm257, %v320, %v321
    %v341 = vsel %vm261, %v340, %v339
    %v342 = vrot.slane %v341, 4
    %v343 = vsel %vm259, %v315, %v322
    %v344 = vsel %vm257, %v323, %v324
    %v345 = vsel %vm261, %v344, %v343
    %v346 = vrot.slane %v345, 4
    %v347 = vsel %vm268, %v319, %v311
    %v348 = vsel %vm266, %v320, %v321
    %v349 = vsel %vm270, %v348, %v347
    %v350 = vrot.slane %v349, 6
    %v351 = vsel %vm268, %v322, %v315
    %v352 = vsel %vm266, %v323, %v324
    %v353 = vsel %vm270, %v352, %v351
    %v354 = vrot.slane %v353, 6
    %v363 = vadd.f32 %v301, %v327
    %v364 = vadd.f32 %v302, %v330
    %v365 = vadd.f32 %v303, %v334
    %v366 = vadd.f32 %v304, %v338
    %v367 = vadd.f32 %v305, %v342
    %v368 = vadd.f32 %v306, %v346
    %v369 = vadd.f32 %v307, %v350
    %v370 = vadd.f32 %v308, %v354
    %371 = vst [vmem:[#allocation8] sm:$0xff] %v363
    %372 = vst [vmem:[#allocation8 + $0x8] sm:$0xff] %v364
    %373 = vst [vmem:[#allocation8 + $0x10] sm:$0xff] %v365
    %374 = vst [vmem:[#allocation8 + $0x18] sm:$0xff] %v366
    %375 = vst [vmem:[#allocation8 + $0x20] sm:$0xff] %v367
    %376 = vst [vmem:[#allocation8 + $0x28] sm:$0xff] %v368
    %377 = vst [vmem:[#allocation8 + $0x30] sm:$0xff] %v369
    %378 = vst [vmem:[#allocation8 + $0x38] sm:$0xff] %v370
    // Predicated region
    $region26: #{tpu_custom_call.1} parent=1 // pred_check
      _
    $region27: #{tpu_custom_call.1} parent=1 // pred_check_branch
      %380 = sbr.rel (0) target = $region29
    $region28: #{tpu_custom_call.1} parent=1 // pred_region
      %382 = vsyncadd [#allocation4], 768
      %s383 = sshll.u32 [#allocation8], 4
      %s384 = int_to_ptr.vmem [resolvable:$true] %s383
      %s385 = sshll.u32 %s3, 4
      %s386 = int_to_ptr.hbm [resolvable:$true] %s385
      %391 = dma.vmem_to_hbm [thread:$0]  %s384, 256, %s386, [#allocation4], 256, 256, 16
    $region29: #{tpu_custom_call.1} parent=1 // pred_fallthru
      _
    // Predicated region
    $region30: #{tpu_custom_call.1} parent=1 // pred_check
      _
    $region31: #{tpu_custom_call.1} parent=1 // pred_check_branch
      %393 = sbr.rel (0) target = $region33
    $region32: #{tpu_custom_call.1} parent=1 // pred_region
      %395 = dma.done [#allocation4], 1024
    $region33: #{tpu_custom_call.1} parent=1 // pred_fallthru
      _
    %396 = vsyncpa [#allocation3], 1
    %397 = vsyncpa [#allocation6], 1
    %398 = vsyncpa [#allocation4], 1

</llo_original>
